<compile_context>
chip_gen: v5e
topology: v5e:2x2
jax: 0.10.0
libtpu: 0.0.40
codegen_flags: <defaults>
</compile_context>

<pallas_src>
import functools

import jax
import jax.numpy as jnp
from jax.experimental import pallas as pl
from jax.experimental.pallas import tpu as pltpu

_EPS = 1e-5
_LANE = 128
_SUBLANE = 8


def _round_up(x, m):
    return (x + m - 1) // m * m


def _vmem_capacity_bytes():
    """Physical VMEM of the current chip; conservative fallback if unknown."""
    try:
        cap = getattr(pltpu.get_tpu_info(), "vmem_capacity_bytes", None)
        if cap:
            return int(cap)
    except Exception:
        pass
    return 64 << 20  # smallest current generation (v7x-class per-core VMEM)


def _vmem_limit(bytes_needed, capacity):
    lim = int(1.5 * bytes_needed) + (4 << 20)
    return int(min(max(lim, 16 << 20), (capacity * 3) // 4))


# ---------------------------------------------------------------------------
# In-kernel helpers / kernels
# ---------------------------------------------------------------------------
def _tile_stats(h, n_valid, tile_n):
    """Per-tile partial BN stats of f32 `h`: row0 = sum, row1 = sum((h-mean_t)^2).

    Returned as an (8, F) sublane-aligned block; rows added by padding are
    masked out.  Centering by the tile mean keeps the cross-tile variance
    combine numerically stable.
    """
    f = h.shape[1]
    if n_valid is None:
        s = jnp.sum(h, axis=0, keepdims=True)
        mean_t = s * (1.0 / float(tile_n))
        d = h - mean_t
    else:
        start = pl.program_id(0) * tile_n
        rows = start + jax.lax.broadcasted_iota(jnp.int32, (tile_n, 1), 0)
        mask = rows < n_valid
        count = jnp.maximum(jnp.minimum(n_valid - start, tile_n), 1)
        count = count.astype(jnp.float32)
        hm = jnp.where(mask, h, 0.0)
        s = jnp.sum(hm, axis=0, keepdims=True)
        mean_t = s / count
        d = jnp.where(mask, h - mean_t, 0.0)
    m2 = jnp.sum(d * d, axis=0, keepdims=True)
    ridx = jax.lax.broadcasted_iota(jnp.int32, (8, f), 0)
    return jnp.where(ridx == 0, s, jnp.where(ridx == 1, m2, 0.0))


def _mm_stats_kernel(x_ref, w_ref, h_ref, st_ref, *, n_valid, tile_n):
    """h = x @ W (bf16 MXU operands, f32 acc), bf16 store + per-tile stats."""
    h = jnp.dot(x_ref[...].astype(jnp.bfloat16), w_ref[...],
                preferred_element_type=jnp.float32)
    h_ref[...] = h.astype(h_ref.dtype)
    st_ref[...] = _tile_stats(h, n_valid, tile_n)


def _bn_relu_mm_stats_kernel(h_ref, s_ref, o_ref, w_ref, h2_ref, st_ref, *,
                             n_valid, tile_n):
    """a = relu(h*s + o) with precomputed full-batch BN coeffs, then matmul."""
    a = jnp.maximum(h_ref[...].astype(jnp.float32) * s_ref[...] + o_ref[...], 0.0)
    h2 = jnp.dot(a.astype(jnp.bfloat16), w_ref[...],
                 preferred_element_type=jnp.float32)
    h2_ref[...] = h2.astype(h2_ref.dtype)
    st_ref[...] = _tile_stats(h2, n_valid, tile_n)


def _scale_shift_kernel(h_ref, s_ref, o_ref, out_ref):
    """Final BatchNorm1d(affine=False) as a precomputed scale/shift."""
    out_ref[...] = h_ref[...].astype(jnp.float32) * s_ref[...] + o_ref[...]


def _fused_kernel(x_ref, w1_ref, g1_ref, b1_ref, w2_ref, g2_ref, b2_ref, w3_ref,
                  out_ref, *, n_valid, inv_n):
    """Whole projector forward with all intermediates VMEM-resident."""
    rows = x_ref.shape[0]
    mask = None
    if n_valid is not None:
        ridx = jax.lax.broadcasted_iota(jnp.int32, (rows, 1), 0)
        mask = ridx < n_valid

    def stats(h):
        hm = h if mask is None else jnp.where(mask, h, 0.0)
        mean = jnp.sum(hm, axis=0, keepdims=True) * inv_n
        d = (h - mean) if mask is None else jnp.where(mask, h - mean, 0.0)
        var = jnp.sum(d * d, axis=0, keepdims=True) * inv_n
        return mean, var

    h = jnp.dot(x_ref[...].astype(jnp.bfloat16), w1_ref[...],
                preferred_element_type=jnp.float32)
    m, v = stats(h)
    a = jnp.maximum((h - m) * (g1_ref[...] * jax.lax.rsqrt(v + _EPS))
                    + b1_ref[...], 0.0)

    h = jnp.dot(a.astype(jnp.bfloat16), w2_ref[...],
                preferred_element_type=jnp.float32)
    m, v = stats(h)
    a = jnp.maximum((h - m) * (g2_ref[...] * jax.lax.rsqrt(v + _EPS))
                    + b2_ref[...], 0.0)

    h = jnp.dot(a.astype(jnp.bfloat16), w3_ref[...],
                preferred_element_type=jnp.float32)
    m, v = stats(h)
    out_ref[...] = (h - m) * jax.lax.rsqrt(v + _EPS)


# ---------------------------------------------------------------------------
# Wrapper
# ---------------------------------------------------------------------------
def _pad_weight(w, din, dout):
    w = w.astype(jnp.bfloat16)
    if w.shape == (din, dout):
        return w
    return jnp.zeros((din, dout), jnp.bfloat16).at[:w.shape[0], :w.shape[1]].set(w)


def _pad_vec(v, f):
    v = v.reshape(1, -1).astype(jnp.float32)
    if v.shape[1] == f:
        return v
    return jnp.zeros((1, f), jnp.float32).at[:, :v.shape[1]].set(v)


def _combine_tile_stats(st, counts, n):
    """Merge per-tile (sum, M2) partials (chunked Welford) -> batch mean/var."""
    grid = counts.shape[0]
    st = st.reshape(grid, 8, st.shape[-1])
    s_t, m2_t = st[:, 0, :], st[:, 1, :]
    mean = jnp.sum(s_t, axis=0, keepdims=True) / n
    mean_t = s_t / counts[:, None]
    m2 = (jnp.sum(m2_t, axis=0, keepdims=True)
          + jnp.sum(counts[:, None] * (mean_t - mean) ** 2, axis=0, keepdims=True))
    var = jnp.maximum(m2 / n, 0.0)
    return mean, var


def projector_forward(x, params, *, tile_n=None, mode="auto"):
    """x: (b, t, dim) float32 -> (b*t, dim2) float32 (training-mode BN stats)."""
    b, t, d = x.shape
    n = b * t
    w1, g1, b1, w2, g2, b2, w3 = params
    dim2 = w3.shape[1]

    d_in = d if d % _LANE == 0 else _round_up(d, _LANE)
    f_p = dim2 if dim2 % _LANE == 0 else _round_up(dim2, _LANE)
    capacity = _vmem_capacity_bytes()

    w1p = _pad_weight(w1, d_in, f_p)
    w2p = _pad_weight(w2, f_p, f_p)
    w3p = _pad_weight(w3, f_p, f_p)
    g1p, b1p = _pad_vec(g1, f_p), _pad_vec(b1, f_p)
    g2p, b2p = _pad_vec(g2, f_p), _pad_vec(b2, f_p)

    z = x.reshape(n, d)

    # ------------- fused single-call path (everything VMEM-resident) -------
    n8 = _round_up(n, _SUBLANE)
    fused_bytes = (n8 * d_in * 2 + (d_in + 2 * f_p) * f_p * 2
                   + 4 * f_p * 4 + 4 * n8 * f_p * 4)
    use_fused = mode == "fused" or (mode == "auto" and 3 * fused_bytes < capacity)

    if use_fused:
        if (n8, d_in) != (n, d):
            zp = jnp.zeros((n8, d_in), jnp.bfloat16).at[:n, :d].set(
                z.astype(jnp.bfloat16))
        else:
            zp = z  # aligned: skip the padding pass, cast to bf16 in-kernel

        def full(shape):
            return pl.BlockSpec(shape, lambda i: (0,) * len(shape))

        out = pl.pallas_call(
            functools.partial(_fused_kernel,
                              n_valid=(None if n8 == n else n),
                              inv_n=1.0 / float(n)),
            grid=(1,),
            in_specs=[full((n8, d_in)), full((d_in, f_p)),
                      full((1, f_p)), full((1, f_p)),
                      full((f_p, f_p)), full((1, f_p)), full((1, f_p)),
                      full((f_p, f_p))],
            out_specs=full((n8, f_p)),
            out_shape=jax.ShapeDtypeStruct((n8, f_p), jnp.float32),
            compiler_params=pltpu.CompilerParams(
                dimension_semantics=("arbitrary",),
                vmem_limit_bytes=_vmem_limit(fused_bytes, capacity)),
        )(zp, w1p, g1p, b1p, w2p, g2p, b2p, w3p)
        return out if (n8, f_p) == (n, dim2) else out[:n, :dim2]

    # ------------- tiled multi-stage pipeline -------------------------------
    if tile_n is None:
        f_big = max(d_in, f_p)
        tile_n = 128
        for cand in (1024, 512, 256, 128):
            foot = (2 * cand * f_big * 4 + 2 * cand * f_p * 2
                    + 2 * f_big * f_p * 2 + 2 * cand * f_p * 4 + (1 << 20))
            if foot <= capacity // 2:
                tile_n = cand
                break
    tile_n = max(_LANE, (int(tile_n) // _LANE) * _LANE)   # multiple of 128
    tile_n = min(tile_n, _round_up(n, _LANE))
    n_p = _round_up(n, tile_n)
    grid = n_p // tile_n
    n_valid = None if n_p == n else n

    if (n_p, d_in) != (n, d):
        zp = jnp.zeros((n_p, d_in), jnp.bfloat16).at[:n, :d].set(
            z.astype(jnp.bfloat16))
    else:
        zp = z  # aligned: no padding pass; cast to bf16 in-kernel

    def row_spec(f):
        return pl.BlockSpec((tile_n, f), lambda i: (i, 0))

    def const_spec(shape):
        return pl.BlockSpec(shape, lambda i: (0,) * len(shape))

    stats_spec = pl.BlockSpec((8, f_p), lambda i: (i, 0))
    stats_shape = jax.ShapeDtypeStruct((grid * 8, f_p), jnp.float32)
    act_shape = jax.ShapeDtypeStruct((n_p, f_p), jnp.bfloat16)
    counts = jnp.minimum(tile_n, n - tile_n * jnp.arange(grid)).astype(jnp.float32)

    stage_vmem = _vmem_limit(
        2 * tile_n * max(d_in, f_p) * 4 + 2 * tile_n * f_p * 2
        + 2 * max(d_in, f_p) * f_p * 2 + 2 * tile_n * f_p * 4, capacity)
    cparams = pltpu.CompilerParams(dimension_semantics=("parallel",),
                                   vmem_limit_bytes=stage_vmem)

    # stage 1: h1 = z @ W1 (bf16 store) + per-tile partial stats
    h1, st1 = pl.pallas_call(
        functools.partial(_mm_stats_kernel, n_valid=n_valid, tile_n=tile_n),
        grid=(grid,),
        in_specs=[pl.BlockSpec((tile_n, d_in), lambda i: (i, 0)),
                  const_spec((d_in, f_p))],
        out_specs=(row_spec(f_p), stats_spec),
        out_shape=(act_shape, stats_shape),
        compiler_params=cparams,
    )(zp, w1p)

    def coeffs(st, gamma, beta):
        mean, var = _combine_tile_stats(st, counts, n)
        s = gamma * jax.lax.rsqrt(var + _EPS)
        return s, beta - mean * s

    def bn_relu_mm(h, s, o, w):
        return pl.pallas_call(
            functools.partial(_bn_relu_mm_stats_kernel, n_valid=n_valid,
                              tile_n=tile_n),
            grid=(grid,),
            in_specs=[row_spec(f_p), const_spec((1, f_p)), const_spec((1, f_p)),
                      const_spec((f_p, f_p))],
            out_specs=(row_spec(f_p), stats_spec),
            out_shape=(act_shape, stats_shape),
            compiler_params=cparams,
        )(h, s, o, w)

    s1, o1 = coeffs(st1, g1p, b1p)
    h2, st2 = bn_relu_mm(h1, s1, o1, w2p)
    s2, o2 = coeffs(st2, g2p, b2p)
    h3, st3 = bn_relu_mm(h2, s2, o2, w3p)

    # final BatchNorm1d(affine=False) applied as scale/shift
    mean3, var3 = _combine_tile_stats(st3, counts, n)
    s3 = jax.lax.rsqrt(var3 + _EPS)
    o3 = -mean3 * s3
    out = pl.pallas_call(
        _scale_shift_kernel,
        grid=(grid,),
        in_specs=[row_spec(f_p), const_spec((1, f_p)), const_spec((1, f_p))],
        out_specs=pl.BlockSpec((tile_n, f_p), lambda i: (i, 0)),
        out_shape=jax.ShapeDtypeStruct((n_p, f_p), jnp.float32),
        compiler_params=cparams,
    )(h3, s3, o3)

    return out if (n_p, f_p) == (n, dim2) else out[:n, :dim2]


# ---------------------------------------------------------------------------
# Params + pure-JAX reference
# ---------------------------------------------------------------------------
def init_params(key, dim, dim2):
    """Params mirroring the PyTorch module's shapes.

    Linear weights stored as (in, out) so the kernel computes z @ W (equivalent
    to PyTorch x @ W.T); BN gammas = 1, betas = 0 (nn.BatchNorm1d init).
    """
    k1, k2, k3 = jax.random.split(key, 3)
    w1 = jax.random.uniform(k1, (dim, dim2), jnp.float32, -1.0, 1.0) / jnp.sqrt(dim)
    w2 = jax.random.uniform(k2, (dim2, dim2), jnp.float32, -1.0, 1.0) / jnp.sqrt(dim2)
    w3 = jax.random.uniform(k3, (dim2, dim2), jnp.float32, -1.0, 1.0) / jnp.sqrt(dim2)
    g1 = jnp.ones((1, dim2), jnp.float32)
    b1 = jnp.zeros((1, dim2), jnp.float32)
    g2 = jnp.ones((1, dim2), jnp.float32)
    b2 = jnp.zeros((1, dim2), jnp.float32)
    return (w1, g1, b1, w2, g2, b2, w3)


def _reference(x, params):
    """Pure-JAX reference (bf16 MXU operands, f32 activations/statistics)."""
    b, t, d = x.shape
    n = b * t
    w1, g1, b1, w2, g2, b2, w3 = params
    z = x.reshape(n, d)

    def mm(a, w):
        return jnp.dot(a.astype(jnp.bfloat16), w.astype(jnp.bfloat16),
                       preferred_element_type=jnp.float32)

    def bn(h, gamma=None, beta=None):
        mu = jnp.mean(h, axis=0, keepdims=True)
        var = jnp.mean((h - mu) ** 2, axis=0, keepdims=True)  # biased variance
        hn = (h - mu) * jax.lax.rsqrt(var + _EPS)
        if gamma is not None:
            hn = hn * gamma + beta
        return hn

    h = jnp.maximum(bn(mm(z, w1), g1, b1), 0.0)
    h = jnp.maximum(bn(mm(h, w2), g2, b2), 0.0)
    return bn(mm(h, w3))


if __name__ == "__main__":
    key = jax.random.PRNGKey(0)
    k1, k2, k3, k4 = jax.random.split(key, 4)

    # Case 1 (small, VMEM-resident): single fused kernel.
    b, t, dim, dim2 = 2, 8, 32, 64
    x = jax.random.normal(k1, (b, t, dim), jnp.float32)
    params = init_params(k2, dim, dim2)
    out = jax.block_until_ready(projector_forward(x, params, mode="fused"))
    ref = jax.block_until_ready(_reference(x, params))
    assert out.shape == (b * t, dim2), out.shape
    assert bool(jnp.all(jnp.isfinite(out)))
    assert bool(jnp.allclose(out, ref, atol=5e-2, rtol=5e-2)), float(
        jnp.max(jnp.abs(out - ref)))

    # Case 2 (unaligned, multi-tile): row-tiled pipeline with bf16
    # intermediates, per-tile partial stats (3 tiles, masked padded rows).
    b, t, dim, dim2 = 3, 100, 96, 192
    x = jax.random.normal(k3, (b, t, dim), jnp.float32)
    params = init_params(k4, dim, dim2)
    out = jax.block_until_ready(
        projector_forward(x, params, mode="tiled", tile_n=128))
    ref = jax.block_until_ready(_reference(x, params))
    assert out.shape == (b * t, dim2), out.shape
    assert bool(jnp.all(jnp.isfinite(out)))
    assert bool(jnp.allclose(out, ref, atol=5e-2, rtol=5e-2)), float(
        jnp.max(jnp.abs(out - ref)))

    print("KERNEL_OK")
</pallas_src>

<mosaic_0001>
module attributes {stable_mosaic.version = 11 : i64} {
  func.func @_fused_kernel(%arg0: i32, %arg1: memref<16x128xbf16, #tpu.memory_space<vmem>>, %arg2: memref<128x128xbf16, #tpu.memory_space<vmem>>, %arg3: memref<1x128xf32, #tpu.memory_space<vmem>>, %arg4: memref<1x128xf32, #tpu.memory_space<vmem>>, %arg5: memref<128x128xbf16, #tpu.memory_space<vmem>>, %arg6: memref<1x128xf32, #tpu.memory_space<vmem>>, %arg7: memref<1x128xf32, #tpu.memory_space<vmem>>, %arg8: memref<128x128xbf16, #tpu.memory_space<vmem>>, %arg9: memref<16x128xf32, #tpu.memory_space<vmem>>) attributes {dimension_semantics = [#tpu.dimension_semantics<arbitrary>], iteration_bounds = array<i64: 1>, scalar_prefetch = 0 : i64, scratch_operands = 0 : i64, tpu.core_type = #tpu.core_type<tc>, window_params = [{pipeline_mode = #tpu.pipeline_mode<synchronous>, transform_indices = @transform_0, window_bounds = array<i64: 16, 128>}, {pipeline_mode = #tpu.pipeline_mode<synchronous>, transform_indices = @transform_1, window_bounds = array<i64: 128, 128>}, {pipeline_mode = #tpu.pipeline_mode<synchronous>, transform_indices = @transform_2, window_bounds = array<i64: 1, 128>}, {pipeline_mode = #tpu.pipeline_mode<synchronous>, transform_indices = @transform_3, window_bounds = array<i64: 1, 128>}, {pipeline_mode = #tpu.pipeline_mode<synchronous>, transform_indices = @transform_4, window_bounds = array<i64: 128, 128>}, {pipeline_mode = #tpu.pipeline_mode<synchronous>, transform_indices = @transform_5, window_bounds = array<i64: 1, 128>}, {pipeline_mode = #tpu.pipeline_mode<synchronous>, transform_indices = @transform_6, window_bounds = array<i64: 1, 128>}, {pipeline_mode = #tpu.pipeline_mode<synchronous>, transform_indices = @transform_7, window_bounds = array<i64: 128, 128>}, {pipeline_mode = #tpu.pipeline_mode<synchronous>, transform_indices = @transform_8, window_bounds = array<i64: 16, 128>}]} {
    %c0 = arith.constant 0 : index
    %c0_0 = arith.constant 0 : index
    %0 = vector.load %arg1[%c0, %c0_0] : memref<16x128xbf16, #tpu.memory_space<vmem>>, vector<16x128xbf16>
    %c0_1 = arith.constant 0 : index
    %c0_2 = arith.constant 0 : index
    %1 = vector.load %arg2[%c0_1, %c0_2] : memref<128x128xbf16, #tpu.memory_space<vmem>>, vector<128x128xbf16>
    %cst = arith.constant dense<0.000000e+00> : vector<16x128xf32>
    %2 = tpu.matmul %0, %1, %cst {dimension_numbers = #tpu.dot_dimension_numbers<[1], [0], [0], [1], [0, 0, 1, 1], [], []>} : vector<16x128xbf16>, vector<128x128xbf16>, vector<16x128xf32> -> vector<16x128xf32>
    %cst_3 = arith.constant dense<0.000000e+00> : vector<128xf32>
    %3 = vector.multi_reduction <add>, %2, %cst_3 [0] : vector<16x128xf32> to vector<128xf32>
    %4 = vector.shape_cast %3 : vector<128xf32> to vector<1x128xf32>
    %cst_4 = arith.constant 6.250000e-02 : f32
    %5 = vector.broadcast %cst_4 : f32 to vector<1x128xf32>
    %6 = arith.mulf %4, %5 : vector<1x128xf32>
    %7 = vector.broadcast %6 : vector<1x128xf32> to vector<16x128xf32>
    %8 = arith.subf %2, %7 : vector<16x128xf32>
    %9 = arith.mulf %8, %8 : vector<16x128xf32>
    %cst_5 = arith.constant dense<0.000000e+00> : vector<128xf32>
    %10 = vector.multi_reduction <add>, %9, %cst_5 [0] : vector<16x128xf32> to vector<128xf32>
    %11 = vector.shape_cast %10 : vector<128xf32> to vector<1x128xf32>
    %cst_6 = arith.constant 6.250000e-02 : f32
    %12 = vector.broadcast %cst_6 : f32 to vector<1x128xf32>
    %13 = arith.mulf %11, %12 : vector<1x128xf32>
    %14 = vector.broadcast %6 : vector<1x128xf32> to vector<16x128xf32>
    %15 = arith.subf %2, %14 : vector<16x128xf32>
    %c0_7 = arith.constant 0 : index
    %c0_8 = arith.constant 0 : index
    %16 = vector.load %arg3[%c0_7, %c0_8] : memref<1x128xf32, #tpu.memory_space<vmem>>, vector<1x128xf32>
    %cst_9 = arith.constant 9.99999974E-6 : f32
    %17 = vector.broadcast %cst_9 : f32 to vector<1x128xf32>
    %18 = arith.addf %13, %17 : vector<1x128xf32>
    %19 = math.rsqrt %18 : vector<1x128xf32>
    %20 = arith.mulf %16, %19 : vector<1x128xf32>
    %21 = vector.broadcast %20 : vector<1x128xf32> to vector<16x128xf32>
    %22 = arith.mulf %15, %21 : vector<16x128xf32>
    %c0_10 = arith.constant 0 : index
    %c0_11 = arith.constant 0 : index
    %23 = vector.load %arg4[%c0_10, %c0_11] : memref<1x128xf32, #tpu.memory_space<vmem>>, vector<1x128xf32>
    %24 = vector.broadcast %23 : vector<1x128xf32> to vector<16x128xf32>
    %25 = arith.addf %22, %24 : vector<16x128xf32>
    %cst_12 = arith.constant 0.000000e+00 : f32
    %26 = vector.broadcast %cst_12 : f32 to vector<16x128xf32>
    %27 = arith.maximumf %25, %26 : vector<16x128xf32>
    %28 = arith.truncf %27 : vector<16x128xf32> to vector<16x128xbf16>
    %c0_13 = arith.constant 0 : index
    %c0_14 = arith.constant 0 : index
    %29 = vector.load %arg5[%c0_13, %c0_14] : memref<128x128xbf16, #tpu.memory_space<vmem>>, vector<128x128xbf16>
    %cst_15 = arith.constant dense<0.000000e+00> : vector<16x128xf32>
    %30 = tpu.matmul %28, %29, %cst_15 {dimension_numbers = #tpu.dot_dimension_numbers<[1], [0], [0], [1], [0, 0, 1, 1], [], []>} : vector<16x128xbf16>, vector<128x128xbf16>, vector<16x128xf32> -> vector<16x128xf32>
    %cst_16 = arith.constant dense<0.000000e+00> : vector<128xf32>
    %31 = vector.multi_reduction <add>, %30, %cst_16 [0] : vector<16x128xf32> to vector<128xf32>
    %32 = vector.shape_cast %31 : vector<128xf32> to vector<1x128xf32>
    %cst_17 = arith.constant 6.250000e-02 : f32
    %33 = vector.broadcast %cst_17 : f32 to vector<1x128xf32>
    %34 = arith.mulf %32, %33 : vector<1x128xf32>
    %35 = vector.broadcast %34 : vector<1x128xf32> to vector<16x128xf32>
    %36 = arith.subf %30, %35 : vector<16x128xf32>
    %37 = arith.mulf %36, %36 : vector<16x128xf32>
    %cst_18 = arith.constant dense<0.000000e+00> : vector<128xf32>
    %38 = vector.multi_reduction <add>, %37, %cst_18 [0] : vector<16x128xf32> to vector<128xf32>
    %39 = vector.shape_cast %38 : vector<128xf32> to vector<1x128xf32>
    %cst_19 = arith.constant 6.250000e-02 : f32
    %40 = vector.broadcast %cst_19 : f32 to vector<1x128xf32>
    %41 = arith.mulf %39, %40 : vector<1x128xf32>
    %42 = vector.broadcast %34 : vector<1x128xf32> to vector<16x128xf32>
    %43 = arith.subf %30, %42 : vector<16x128xf32>
    %c0_20 = arith.constant 0 : index
    %c0_21 = arith.constant 0 : index
    %44 = vector.load %arg6[%c0_20, %c0_21] : memref<1x128xf32, #tpu.memory_space<vmem>>, vector<1x128xf32>
    %cst_22 = arith.constant 9.99999974E-6 : f32
    %45 = vector.broadcast %cst_22 : f32 to vector<1x128xf32>
    %46 = arith.addf %41, %45 : vector<1x128xf32>
    %47 = math.rsqrt %46 : vector<1x128xf32>
    %48 = arith.mulf %44, %47 : vector<1x128xf32>
    %49 = vector.broadcast %48 : vector<1x128xf32> to vector<16x128xf32>
    %50 = arith.mulf %43, %49 : vector<16x128xf32>
    %c0_23 = arith.constant 0 : index
    %c0_24 = arith.constant 0 : index
    %51 = vector.load %arg7[%c0_23, %c0_24] : memref<1x128xf32, #tpu.memory_space<vmem>>, vector<1x128xf32>
    %52 = vector.broadcast %51 : vector<1x128xf32> to vector<16x128xf32>
    %53 = arith.addf %50, %52 : vector<16x128xf32>
    %cst_25 = arith.constant 0.000000e+00 : f32
    %54 = vector.broadcast %cst_25 : f32 to vector<16x128xf32>
    %55 = arith.maximumf %53, %54 : vector<16x128xf32>
    %56 = arith.truncf %55 : vector<16x128xf32> to vector<16x128xbf16>
    %c0_26 = arith.constant 0 : index
    %c0_27 = arith.constant 0 : index
    %57 = vector.load %arg8[%c0_26, %c0_27] : memref<128x128xbf16, #tpu.memory_space<vmem>>, vector<128x128xbf16>
    %cst_28 = arith.constant dense<0.000000e+00> : vector<16x128xf32>
    %58 = tpu.matmul %56, %57, %cst_28 {dimension_numbers = #tpu.dot_dimension_numbers<[1], [0], [0], [1], [0, 0, 1, 1], [], []>} : vector<16x128xbf16>, vector<128x128xbf16>, vector<16x128xf32> -> vector<16x128xf32>
    %cst_29 = arith.constant dense<0.000000e+00> : vector<128xf32>
    %59 = vector.multi_reduction <add>, %58, %cst_29 [0] : vector<16x128xf32> to vector<128xf32>
    %60 = vector.shape_cast %59 : vector<128xf32> to vector<1x128xf32>
    %cst_30 = arith.constant 6.250000e-02 : f32
    %61 = vector.broadcast %cst_30 : f32 to vector<1x128xf32>
    %62 = arith.mulf %60, %61 : vector<1x128xf32>
    %63 = vector.broadcast %62 : vector<1x128xf32> to vector<16x128xf32>
    %64 = arith.subf %58, %63 : vector<16x128xf32>
    %65 = arith.mulf %64, %64 : vector<16x128xf32>
    %cst_31 = arith.constant dense<0.000000e+00> : vector<128xf32>
    %66 = vector.multi_reduction <add>, %65, %cst_31 [0] : vector<16x128xf32> to vector<128xf32>
    %67 = vector.shape_cast %66 : vector<128xf32> to vector<1x128xf32>
    %cst_32 = arith.constant 6.250000e-02 : f32
    %68 = vector.broadcast %cst_32 : f32 to vector<1x128xf32>
    %69 = arith.mulf %67, %68 : vector<1x128xf32>
    %70 = vector.broadcast %62 : vector<1x128xf32> to vector<16x128xf32>
    %71 = arith.subf %58, %70 : vector<16x128xf32>
    %cst_33 = arith.constant 9.99999974E-6 : f32
    %72 = vector.broadcast %cst_33 : f32 to vector<1x128xf32>
    %73 = arith.addf %69, %72 : vector<1x128xf32>
    %74 = math.rsqrt %73 : vector<1x128xf32>
    %75 = vector.broadcast %74 : vector<1x128xf32> to vector<16x128xf32>
    %76 = arith.mulf %71, %75 : vector<16x128xf32>
    %c0_34 = arith.constant 0 : index
    %c0_35 = arith.constant 0 : index
    %77 = vector.load %arg9[%c0_34, %c0_35] : memref<16x128xf32, #tpu.memory_space<vmem>>, vector<16x128xf32>
    tpu.vector_store %arg9[%c0_34, %c0_35], %76 {strides = array<i32>} : memref<16x128xf32, #tpu.memory_space<vmem>>, vector<16x128xf32>,
    return
  }
  func.func @transform_0(%arg0: i32) -> (i32, i32) {
    %c0_i32 = arith.constant 0 : i32
    %c0_i32_0 = arith.constant 0 : i32
    %c0_i32_1 = arith.constant 0 : i32
    return %c0_i32, %c0_i32_0 : i32, i32
  }
  func.func @transform_1(%arg0: i32) -> (i32, i32) {
    %c0_i32 = arith.constant 0 : i32
    %c0_i32_0 = arith.constant 0 : i32
    %c0_i32_1 = arith.constant 0 : i32
    return %c0_i32, %c0_i32_0 : i32, i32
  }
  func.func @transform_2(%arg0: i32) -> (i32, i32) {
    %c0_i32 = arith.constant 0 : i32
    %c0_i32_0 = arith.constant 0 : i32
    %c0_i32_1 = arith.constant 0 : i32
    return %c0_i32, %c0_i32_0 : i32, i32
  }
  func.func @transform_3(%arg0: i32) -> (i32, i32) {
    %c0_i32 = arith.constant 0 : i32
    %c0_i32_0 = arith.constant 0 : i32
    %c0_i32_1 = arith.constant 0 : i32
    return %c0_i32, %c0_i32_0 : i32, i32
  }
  func.func @transform_4(%arg0: i32) -> (i32, i32) {
    %c0_i32 = arith.constant 0 : i32
    %c0_i32_0 = arith.constant 0 : i32
    %c0_i32_1 = arith.constant 0 : i32
    return %c0_i32, %c0_i32_0 : i32, i32
  }
  func.func @transform_5(%arg0: i32) -> (i32, i32) {
    %c0_i32 = arith.constant 0 : i32
    %c0_i32_0 = arith.constant 0 : i32
    %c0_i32_1 = arith.constant 0 : i32
    return %c0_i32, %c0_i32_0 : i32, i32
  }
  func.func @transform_6(%arg0: i32) -> (i32, i32) {
    %c0_i32 = arith.constant 0 : i32
    %c0_i32_0 = arith.constant 0 : i32
    %c0_i32_1 = arith.constant 0 : i32
    return %c0_i32, %c0_i32_0 : i32, i32
  }
  func.func @transform_7(%arg0: i32) -> (i32, i32) {
    %c0_i32 = arith.constant 0 : i32
    %c0_i32_0 = arith.constant 0 : i32
    %c0_i32_1 = arith.constant 0 : i32
    return %c0_i32, %c0_i32_0 : i32, i32
  }
  func.func @transform_8(%arg0: i32) -> (i32, i32) {
    %c0_i32 = arith.constant 0 : i32
    %c0_i32_0 = arith.constant 0 : i32
    %c0_i32_1 = arith.constant 0 : i32
    return %c0_i32, %c0_i32_0 : i32, i32
  }
}

</mosaic_0001>

<llo_original>
// kernel: tpu_custom_call.1
$region0: #{tpu_custom_call.1}
  #allocation0 [shape = 'u32[]', space=smem, size = 0x4, offset = 0x4, fixed_abs, tag = 'smem constant byte address 0x4 - core index']
  #allocation1 [shape = 'u32[72,128]{1,0:T(1,128)}', space=vmem, size = 0x9000, scoped, tag = 'internal scratch']
  %s0 = inlined_call_operand.hbm [shape: bf16[16,128], index: 0, kind: input, shape index: {}]
  %s1 = inlined_call_operand.hbm [shape: bf16[128,128], index: 1, kind: input, shape index: {}]
  %s2 = inlined_call_operand.vmem [shape: f32[1,128], index: 2, kind: input, shape index: {}]
  %s3 = inlined_call_operand.vmem [shape: f32[1,128], index: 3, kind: input, shape index: {}]
  %s4 = inlined_call_operand.hbm [shape: bf16[128,128], index: 4, kind: input, shape index: {}]
  %s5 = inlined_call_operand.vmem [shape: f32[1,128], index: 5, kind: input, shape index: {}]
  %s6 = inlined_call_operand.vmem [shape: f32[1,128], index: 6, kind: input, shape index: {}]
  %s7 = inlined_call_operand.hbm [shape: bf16[128,128], index: 7, kind: input, shape index: {}]
  %s8 = inlined_call_operand.hbm [shape: f32[16,128], index: 8, kind: output, shape index: {}]
  %s9 = sld [smem:[#allocation0]]
  $region58: #{tpu_custom_call.1} parent=0
    _
  %s11 = ssub.s32 1, %s9
  %s12 = scalar_select 0, %s11, %s9
  $region1: #{tpu_custom_call.1} parent=0
    #allocation2 [shape = 'u8[4096]{0}', space=vmem, size = 0x1000, scoped, tag = 'input window, operand 0, single buffered']
    #allocation3 [shape = 's32[1]{0}', space=sflag, size = 0x4, scoped, tag = 'scoped memory for tpu_custom_call.1']
    #allocation4 [shape = 's32[1]{0}', space=sflag, size = 0x4, scoped, tag = 'scoped memory for tpu_custom_call.1']
    #allocation5 [shape = 'u8[32768]{0}', space=vmem, size = 0x8000, scoped, tag = 'input window, operand 1, single buffered']
    #allocation6 [shape = 's32[1]{0}', space=sflag, size = 0x4, scoped, tag = 'scoped memory for tpu_custom_call.1']
    #allocation7 [shape = 'u8[32768]{0}', space=vmem, size = 0x8000, scoped, tag = 'input window, operand 4, single buffered']
    #allocation8 [shape = 'u8[32768]{0}', space=vmem, size = 0x8000, scoped, tag = 'input window, operand 7, single buffered']
    #allocation9 [shape = 's32[1]{0}', space=sflag, size = 0x4, scoped, tag = 'scoped memory for tpu_custom_call.1']
    #allocation10 [shape = 'u8[8192]{0}', space=vmem, size = 0x2000, scoped, tag = 'output window, operand 0, single buffered']
    %13 = vsyncpa [#allocation3], 0
    %14 = vsyncpa [#allocation6], 0
    %15 = vsyncpa [#allocation9], 0
    %16 = vsyncpa [#allocation4], 0
    // Predicated region
    $region2: #{tpu_custom_call.1} parent=1 // pred_check
      _
    $region3: #{tpu_custom_call.1} parent=1 // pred_check_branch
      %18 = sbr.rel (0) target = $region5
    $region4: #{tpu_custom_call.1} parent=1 // pred_region
      %20 = vsyncadd [#allocation3], 0
      %s21 = sshll.u32 %s0, 4
      %s22 = int_to_ptr.hbm [resolvable:$true] %s21
      %s23 = sshll.u32 [#allocation2], 4
      %s24 = int_to_ptr.vmem [resolvable:$true] %s23
      %29 = dma.hbm_to_vmem [thread:$0]  %s22, 128, %s24, [#allocation3], 64, 64, 4
    $region5: #{tpu_custom_call.1} parent=1 // pred_fallthru
      _
    // Predicated region
    $region6: #{tpu_custom_call.1} parent=1 // pred_check
      _
    $region7: #{tpu_custom_call.1} parent=1 // pred_check_branch
      %31 = sbr.rel (0) target = $region9
    $region8: #{tpu_custom_call.1} parent=1 // pred_region
      %33 = vsyncadd [#allocation6], 0
      %s34 = sshll.u32 %s1, 4
      %s35 = int_to_ptr.hbm [resolvable:$true] %s34
      %s36 = sshll.u32 [#allocation5], 4
      %s37 = int_to_ptr.vmem [resolvable:$true] %s36
      %42 = dma.hbm_to_vmem [thread:$0]  %s35, 1024, %s37, [#allocation6], 64, 64, 4
    $region9: #{tpu_custom_call.1} parent=1 // pred_fallthru
      _
    // Predicated region
    $region10: #{tpu_custom_call.1} parent=1 // pred_check
      _
    $region11: #{tpu_custom_call.1} parent=1 // pred_check_branch
      %44 = sbr.rel (0) target = $region13
    $region12: #{tpu_custom_call.1} parent=1 // pred_region
      _
    $region13: #{tpu_custom_call.1} parent=1 // pred_fallthru
      _
    // Predicated region
    $region14: #{tpu_custom_call.1} parent=1 // pred_check
      _
    $region15: #{tpu_custom_call.1} parent=1 // pred_check_branch
      %46 = sbr.rel (0) target = $region17
    $region16: #{tpu_custom_call.1} parent=1 // pred_region
      _
    $region17: #{tpu_custom_call.1} parent=1 // pred_fallthru
      _
    // Predicated region
    $region18: #{tpu_custom_call.1} parent=1 // pred_check
      _
    $region19: #{tpu_custom_call.1} parent=1 // pred_check_branch
      %48 = sbr.rel (0) target = $region21
    $region20: #{tpu_custom_call.1} parent=1 // pred_region
      %50 = vsyncadd [#allocation6], 0
      %s51 = sshll.u32 %s4, 4
      %s52 = int_to_ptr.hbm [resolvable:$true] %s51
      %s53 = sshll.u32 [#allocation7], 4
      %s54 = int_to_ptr.vmem [resolvable:$true] %s53
      %59 = dma.hbm_to_vmem [thread:$0]  %s52, 1024, %s54, [#allocation6], 64, 64, 4
    $region21: #{tpu_custom_call.1} parent=1 // pred_fallthru
      _
    // Predicated region
    $region22: #{tpu_custom_call.1} parent=1 // pred_check
      _
    $region23: #{tpu_custom_call.1} parent=1 // pred_check_branch
      %61 = sbr.rel (0) target = $region25
    $region24: #{tpu_custom_call.1} parent=1 // pred_region
      _
    $region25: #{tpu_custom_call.1} parent=1 // pred_fallthru
      _
    // Predicated region
    $region26: #{tpu_custom_call.1} parent=1 // pred_check
      _
    $region27: #{tpu_custom_call.1} parent=1 // pred_check_branch
      %63 = sbr.rel (0) target = $region29
    $region28: #{tpu_custom_call.1} parent=1 // pred_region
      _
    $region29: #{tpu_custom_call.1} parent=1 // pred_fallthru
      _
    // Predicated region
    $region30: #{tpu_custom_call.1} parent=1 // pred_check
      _
    $region31: #{tpu_custom_call.1} parent=1 // pred_check_branch
      %65 = sbr.rel (0) target = $region33
    $region32: #{tpu_custom_call.1} parent=1 // pred_region
      %67 = vsyncadd [#allocation9], 0
      %s68 = sshll.u32 %s7, 4
      %s69 = int_to_ptr.hbm [resolvable:$true] %s68
      %s70 = sshll.u32 [#allocation8], 4
      %s71 = int_to_ptr.vmem [resolvable:$true] %s70
      %76 = dma.hbm_to_vmem [thread:$0]  %s69, 1024, %s71, [#allocation9], 64, 64, 4
    $region33: #{tpu_custom_call.1} parent=1 // pred_fallthru
      _
    // Predicated region
    $region34: #{tpu_custom_call.1} parent=1 // pred_check
      _
    $region35: #{tpu_custom_call.1} parent=1 // pred_check_branch
      %78 = sbr.rel (0) target = $region37
    $region36: #{tpu_custom_call.1} parent=1 // pred_region
      %80 = dma.done [#allocation3], 128
    $region37: #{tpu_custom_call.1} parent=1 // pred_fallthru
      _
    // Predicated region
    $region38: #{tpu_custom_call.1} parent=1 // pred_check
      _
    $region39: #{tpu_custom_call.1} parent=1 // pred_check_branch
      %82 = sbr.rel (0) target = $region41
    $region40: #{tpu_custom_call.1} parent=1 // pred_region
      %84 = dma.done [#allocation6], 1024
    $region41: #{tpu_custom_call.1} parent=1 // pred_fallthru
      _
    // Predicated region
    $region42: #{tpu_custom_call.1} parent=1 // pred_check
      _
    $region43: #{tpu_custom_call.1} parent=1 // pred_check_branch
      %86 = sbr.rel (0) target = $region45
    $region44: #{tpu_custom_call.1} parent=1 // pred_region
      %88 = dma.done [#allocation6], 1024
    $region45: #{tpu_custom_call.1} parent=1 // pred_fallthru
      _
    // Predicated region
    $region46: #{tpu_custom_call.1} parent=1 // pred_check
      _
    $region47: #{tpu_custom_call.1} parent=1 // pred_check_branch
      %90 = sbr.rel (0) target = $region49
    $region48: #{tpu_custom_call.1} parent=1 // pred_region
      %92 = dma.done [#allocation9], 1024
    $region49: #{tpu_custom_call.1} parent=1 // pred_fallthru
      _
    %v93 = vld [vmem:[#allocation2] sm:$0xf]
    %v94 = vld [vmem:[#allocation2 + $0x4] sm:$0xf]
    %v95 = vld [vmem:[#allocation5] sm:$0xf]
    %v96 = vld [vmem:[#allocation5 + $0x4] sm:$0xf]
    %v97 = vld [vmem:[#allocation5 + $0x8] sm:$0xf]
    %v98 = vld [vmem:[#allocation5 + $0xc] sm:$0xf]
    %v99 = vld [vmem:[#allocation5 + $0x10] sm:$0xf]
    %v100 = vld [vmem:[#allocation5 + $0x14] sm:$0xf]
    %v101 = vld [vmem:[#allocation5 + $0x18] sm:$0xf]
    %v102 = vld [vmem:[#allocation5 + $0x1c] sm:$0xf]
    %v103 = vld [vmem:[#allocation5 + $0x20] sm:$0xf]
    %v104 = vld [vmem:[#allocation5 + $0x24] sm:$0xf]
    %v105 = vld [vmem:[#allocation5 + $0x28] sm:$0xf]
    %v106 = vld [vmem:[#allocation5 + $0x2c] sm:$0xf]
    %v107 = vld [vmem:[#allocation5 + $0x30] sm:$0xf]
    %v108 = vld [vmem:[#allocation5 + $0x34] sm:$0xf]
    %v109 = vld [vmem:[#allocation5 + $0x38] sm:$0xf]
    %v110 = vld [vmem:[#allocation5 + $0x3c] sm:$0xf]
    %v113 = vunpack.c.l.b16 %v93
    %v114 = vunpack.c.l.b16 %v94
    %v115 = vpack.c.b16 %v114, %v113
    %v133 = vunpack.c.l.b16 %v95
    %v134 = vunpack.c.l.b16 %v96
    %v135 = vunpack.c.l.b16 %v97
    %v136 = vunpack.c.l.b16 %v98
    %v137 = vunpack.c.l.b16 %v99
    %v138 = vunpack.c.l.b16 %v100
    %v139 = vunpack.c.l.b16 %v101
    %v140 = vunpack.c.l.b16 %v102
    %v141 = vunpack.c.l.b16 %v103
    %v142 = vunpack.c.l.b16 %v104
    %v143 = vunpack.c.l.b16 %v105
    %v144 = vunpack.c.l.b16 %v106
    %v145 = vunpack.c.l.b16 %v107
    %v146 = vunpack.c.l.b16 %v108
    %v147 = vunpack.c.l.b16 %v109
    %v148 = vunpack.c.l.b16 %v110
    %v149 = vpack.c.b16 %v134, %v133
    %v150 = vpack.c.b16 %v136, %v135
    %v151 = vpack.c.b16 %v138, %v137
    %v152 = vpack.c.b16 %v140, %v139
    %v153 = vpack.c.b16 %v142, %v141
    %v154 = vpack.c.b16 %v144, %v143
    %v155 = vpack.c.b16 %v146, %v145
    %v156 = vpack.c.b16 %v148, %v147
    %165 = vmatpush.bf16.msra.mxu0 %v156
    %166 = vmatpush.bf16.msra.mxu0 %v155
    %167 = vmatpush.bf16.msra.mxu0 %v154
    %168 = vmatpush.bf16.msra.mxu0 %v153
    %169 = vmatpush.bf16.msra.mxu0 %v152
    %170 = vmatpush.bf16.msra.mxu0 %v151
    %171 = vmatpush.bf16.msra.mxu0 %v150
    %172 = vmatpush.bf16.msra.mxu0 %v149
    %173 = vmatmul.bf16.gmra.mxu0 %v115
    %v174 = vpop.f32.mrf.mxu0
    %v175 = vadd.f32 0.0, %v174
    %v176 = vpop.f32.mrf.mxu0
    %v177 = vadd.f32 0.0, %v176
    %178 = vdwg.mxu0
    %v179 = vadd.f32 %v175, %v177
    %v180 = vrot.slane %v179, 4
    %v181 = vadd.f32 %v179, %v180
    %v182 = vrot.slane %v181, 2
    %v183 = vadd.f32 %v181, %v182
    %v184 = vrot.slane %v183, 1
    %v185 = vadd.f32 %v183, %v184
    %v186 = vmul.f32 %v185, 0.0625
    %v187 = vsub.f32 %v175, %v186
    %v188 = vsub.f32 %v177, %v186
    %v189 = vmul.f32 %v187, %v187
    %v190 = vmul.f32 %v188, %v188
    %v191 = vadd.f32 %v189, %v190
    %v192 = vrot.slane %v191, 4
    %v193 = vadd.f32 %v191, %v192
    %v194 = vrot.slane %v193, 2
    %v195 = vadd.f32 %v193, %v194
    %v196 = vrot.slane %v195, 1
    %v197 = vadd.f32 %v195, %v196
    %v198 = vmul.f32 %v197, 0.0625
    %v199 = vld [vmem:[%s2] sm:$0x1]
    %v200 = vadd.f32 %v198, 1e-05
    %v201 = vrsqrt.pop %v200
    %v202 = vmul.f32 %v201, %v200
    %v203 = vmul.f32 %v202, %v201
    %v204 = vmul.f32 0.5, %v203
    %v205 = vsub.f32 1.5, %v204
    %v206 = vmul.f32 %v201, %v205
    %vm207 = vweird.f32 %v200
    %vm208 = vweird.f32 %v201
    %vm209 = vmor %vm207, %vm208
    %v210 = vsel %vm209, %v201, %v206
    %v211 = vmul.f32 %v199, %v210
    %v213 = vperm.slane %v211, 0
    %v215 = vmul.f32 %v187, %v213
    %v216 = vmul.f32 %v188, %v213
    %v217 = vld [vmem:[%s3] sm:$0x1]
    %v219 = vperm.slane %v217, 0
    %v221 = vadd.f32 %v215, %v219
    %v222 = vadd.f32 %v216, %v219
    %v223 = vmax.f32 %v221, 0.0
    %v224 = vmax.f32 %v222, 0.0
    %v225 = vpack.c.bf16 %v224, %v223
    %v226 = vld [vmem:[#allocation7] sm:$0xf]
    %v227 = vld [vmem:[#allocation7 + $0x4] sm:$0xf]
    %v228 = vld [vmem:[#allocation7 + $0x8] sm:$0xf]
    %v229 = vld [vmem:[#allocation7 + $0xc] sm:$0xf]
    %v230 = vld [vmem:[#allocation7 + $0x10] sm:$0xf]
    %v231 = vld [vmem:[#allocation7 + $0x14] sm:$0xf]
    %v232 = vld [vmem:[#allocation7 + $0x18] sm:$0xf]
    %v233 = vld [vmem:[#allocation7 + $0x1c] sm:$0xf]
    %v234 = vld [vmem:[#allocation7 + $0x20] sm:$0xf]
    %v235 = vld [vmem:[#allocation7 + $0x24] sm:$0xf]
    %v236 = vld [vmem:[#allocation7 + $0x28] sm:$0xf]
    %v237 = vld [vmem:[#allocation7 + $0x2c] sm:$0xf]
    %v238 = vld [vmem:[#allocation7 + $0x30] sm:$0xf]
    %v239 = vld [vmem:[#allocation7 + $0x34] sm:$0xf]
    %v240 = vld [vmem:[#allocation7 + $0x38] sm:$0xf]
    %v241 = vld [vmem:[#allocation7 + $0x3c] sm:$0xf]
    %v258 = vunpack.c.l.b16 %v226
    %v259 = vunpack.c.l.b16 %v227
    %v260 = vunpack.c.l.b16 %v228
    %v261 = vunpack.c.l.b16 %v229
    %v262 = vunpack.c.l.b16 %v230
    %v263 = vunpack.c.l.b16 %v231
    %v264 = vunpack.c.l.b16 %v232
    %v265 = vunpack.c.l.b16 %v233
    %v266 = vunpack.c.l.b16 %v234
    %v267 = vunpack.c.l.b16 %v235
    %v268 = vunpack.c.l.b16 %v236
    %v269 = vunpack.c.l.b16 %v237
    %v270 = vunpack.c.l.b16 %v238
    %v271 = vunpack.c.l.b16 %v239
    %v272 = vunpack.c.l.b16 %v240
    %v273 = vunpack.c.l.b16 %v241
    %v274 = vpack.c.b16 %v259, %v258
    %v275 = vpack.c.b16 %v261, %v260
    %v276 = vpack.c.b16 %v263, %v262
    %v277 = vpack.c.b16 %v265, %v264
    %v278 = vpack.c.b16 %v267, %v266
    %v279 = vpack.c.b16 %v269, %v268
    %v280 = vpack.c.b16 %v271, %v270
    %v281 = vpack.c.b16 %v273, %v272
    %290 = vmatpush.bf16.msra.mxu0 %v281
    %291 = vmatpush.bf16.msra.mxu0 %v280
    %292 = vmatpush.bf16.msra.mxu0 %v279
    %293 = vmatpush.bf16.msra.mxu0 %v278
    %294 = vmatpush.bf16.msra.mxu0 %v277
    %295 = vmatpush.bf16.msra.mxu0 %v276
    %296 = vmatpush.bf16.msra.mxu0 %v275
    %297 = vmatpush.bf16.msra.mxu0 %v274
    %298 = vmatmul.bf16.gmra.mxu0 %v225
    %v299 = vpop.f32.mrf.mxu0
    %v300 = vadd.f32 0.0, %v299
    %v301 = vpop.f32.mrf.mxu0
    %v302 = vadd.f32 0.0, %v301
    %303 = vdwg.mxu0
    %v304 = vadd.f32 %v300, %v302
    %v305 = vrot.slane %v304, 4
    %v306 = vadd.f32 %v304, %v305
    %v307 = vrot.slane %v306, 2
    %v308 = vadd.f32 %v306, %v307
    %v309 = vrot.slane %v308, 1
    %v310 = vadd.f32 %v308, %v309
    %v311 = vmul.f32 %v310, 0.0625
    %v312 = vsub.f32 %v300, %v311
    %v313 = vsub.f32 %v302, %v311
    %v314 = vmul.f32 %v312, %v312
    %v315 = vmul.f32 %v313, %v313
    %v316 = vadd.f32 %v314, %v315
    %v317 = vrot.slane %v316, 4
    %v318 = vadd.f32 %v316, %v317
    %v319 = vrot.slane %v318, 2
    %v320 = vadd.f32 %v318, %v319
    %v321 = vrot.slane %v320, 1
    %v322 = vadd.f32 %v320, %v321
    %v323 = vmul.f32 %v322, 0.0625
    %v324 = vld [vmem:[%s5] sm:$0x1]
    %v325 = vadd.f32 %v323, 1e-05
    %v326 = vrsqrt.pop %v325
    %v327 = vmul.f32 %v326, %v325
    %v328 = vmul.f32 %v327, %v326
    %v329 = vmul.f32 0.5, %v328
    %v330 = vsub.f32 1.5, %v329
    %v331 = vmul.f32 %v326, %v330
    %vm332 = vweird.f32 %v325
    %vm333 = vweird.f32 %v326
    %vm334 = vmor %vm332, %vm333
    %v335 = vsel %vm334, %v326, %v331
    %v336 = vmul.f32 %v324, %v335
    %v338 = vperm.slane %v336, 0
    %v340 = vmul.f32 %v312, %v338
    %v341 = vmul.f32 %v313, %v338
    %v342 = vld [vmem:[%s6] sm:$0x1]
    %v344 = vperm.slane %v342, 0
    %v346 = vadd.f32 %v340, %v344
    %v347 = vadd.f32 %v341, %v344
    %v348 = vmax.f32 %v346, 0.0
    %v349 = vmax.f32 %v347, 0.0
    %v350 = vpack.c.bf16 %v349, %v348
    %v351 = vld [vmem:[#allocation8] sm:$0xf]
    %v352 = vld [vmem:[#allocation8 + $0x4] sm:$0xf]
    %v353 = vld [vmem:[#allocation8 + $0x8] sm:$0xf]
    %v354 = vld [vmem:[#allocation8 + $0xc] sm:$0xf]
    %v355 = vld [vmem:[#allocation8 + $0x10] sm:$0xf]
    %v356 = vld [vmem:[#allocation8 + $0x14] sm:$0xf]
    %v357 = vld [vmem:[#allocation8 + $0x18] sm:$0xf]
    %v358 = vld [vmem:[#allocation8 + $0x1c] sm:$0xf]
    %v359 = vld [vmem:[#allocation8 + $0x20] sm:$0xf]
    %v360 = vld [vmem:[#allocation8 + $0x24] sm:$0xf]
    %v361 = vld [vmem:[#allocation8 + $0x28] sm:$0xf]
    %v362 = vld [vmem:[#allocation8 + $0x2c] sm:$0xf]
    %v363 = vld [vmem:[#allocation8 + $0x30] sm:$0xf]
    %v364 = vld [vmem:[#allocation8 + $0x34] sm:$0xf]
    %v365 = vld [vmem:[#allocation8 + $0x38] sm:$0xf]
    %v366 = vld [vmem:[#allocation8 + $0x3c] sm:$0xf]
    %v383 = vunpack.c.l.b16 %v351
    %v384 = vunpack.c.l.b16 %v352
    %v385 = vunpack.c.l.b16 %v353
    %v386 = vunpack.c.l.b16 %v354
    %v387 = vunpack.c.l.b16 %v355
    %v388 = vunpack.c.l.b16 %v356
    %v389 = vunpack.c.l.b16 %v357
    %v390 = vunpack.c.l.b16 %v358
    %v391 = vunpack.c.l.b16 %v359
    %v392 = vunpack.c.l.b16 %v360
    %v393 = vunpack.c.l.b16 %v361
    %v394 = vunpack.c.l.b16 %v362
    %v395 = vunpack.c.l.b16 %v363
    %v396 = vunpack.c.l.b16 %v364
    %v397 = vunpack.c.l.b16 %v365
    %v398 = vunpack.c.l.b16 %v366
    %v399 = vpack.c.b16 %v384, %v383
    %v400 = vpack.c.b16 %v386, %v385
    %v401 = vpack.c.b16 %v388, %v387
    %v402 = vpack.c.b16 %v390, %v389
    %v403 = vpack.c.b16 %v392, %v391
    %v404 = vpack.c.b16 %v394, %v393
    %v405 = vpack.c.b16 %v396, %v395
    %v406 = vpack.c.b16 %v398, %v397
    %415 = vmatpush.bf16.msra.mxu0 %v406
    %416 = vmatpush.bf16.msra.mxu0 %v405
    %417 = vmatpush.bf16.msra.mxu0 %v404
    %418 = vmatpush.bf16.msra.mxu0 %v403
    %419 = vmatpush.bf16.msra.mxu0 %v402
    %420 = vmatpush.bf16.msra.mxu0 %v401
    %421 = vmatpush.bf16.msra.mxu0 %v400
    %422 = vmatpush.bf16.msra.mxu0 %v399
    %423 = vmatmul.bf16.gmra.mxu0 %v350
    %v424 = vpop.f32.mrf.mxu0
    %v425 = vadd.f32 0.0, %v424
    %v426 = vpop.f32.mrf.mxu0
    %v427 = vadd.f32 0.0, %v426
    %428 = vdwg.mxu0
    %v429 = vadd.f32 %v425, %v427
    %v430 = vrot.slane %v429, 4
    %v431 = vadd.f32 %v429, %v430
    %v432 = vrot.slane %v431, 2
    %v433 = vadd.f32 %v431, %v432
    %v434 = vrot.slane %v433, 1
    %v435 = vadd.f32 %v433, %v434
    %v436 = vmul.f32 %v435, 0.0625
    %v437 = vsub.f32 %v425, %v436
    %v438 = vsub.f32 %v427, %v436
    %v439 = vmul.f32 %v437, %v437
    %v440 = vmul.f32 %v438, %v438
    %v441 = vadd.f32 %v439, %v440
    %v442 = vrot.slane %v441, 4
    %v443 = vadd.f32 %v441, %v442
    %v444 = vrot.slane %v443, 2
    %v445 = vadd.f32 %v443, %v444
    %v446 = vrot.slane %v445, 1
    %v447 = vadd.f32 %v445, %v446
    %v448 = vmul.f32 %v447, 0.0625
    %v449 = vadd.f32 %v448, 1e-05
    %v450 = vrsqrt.pop %v449
    %v451 = vmul.f32 %v450, %v449
    %v452 = vmul.f32 %v451, %v450
    %v453 = vmul.f32 0.5, %v452
    %v454 = vsub.f32 1.5, %v453
    %v455 = vmul.f32 %v450, %v454
    %vm456 = vweird.f32 %v449
    %vm457 = vweird.f32 %v450
    %vm458 = vmor %vm456, %vm457
    %v459 = vsel %vm458, %v450, %v455
    %v460 = vmul.f32 %v437, %v459
    %v461 = vmul.f32 %v438, %v459
    %462 = vst [vmem:[#allocation10] sm:$0xff] %v460
    %463 = vst [vmem:[#allocation10 + $0x8] sm:$0xff] %v461
    // Predicated region
    $region50: #{tpu_custom_call.1} parent=1 // pred_check
      _
    $region51: #{tpu_custom_call.1} parent=1 // pred_check_branch
      %465 = sbr.rel (0) target = $region53
    $region52: #{tpu_custom_call.1} parent=1 // pred_region
      %467 = vsyncadd [#allocation4], 0
      %s468 = sshll.u32 [#allocation10], 4
      %s469 = int_to_ptr.vmem [resolvable:$true] %s468
      %s470 = sshll.u32 %s8, 4
      %s471 = int_to_ptr.hbm [resolvable:$true] %s470
      %476 = dma.vmem_to_hbm [thread:$0]  %s469, 256, %s471, [#allocation4], 128, 128, 8
    $region53: #{tpu_custom_call.1} parent=1 // pred_fallthru
      _
    // Predicated region
    $region54: #{tpu_custom_call.1} parent=1 // pred_check
      _
    $region55: #{tpu_custom_call.1} parent=1 // pred_check_branch
      %478 = sbr.rel (0) target = $region57
    $region56: #{tpu_custom_call.1} parent=1 // pred_region
      %480 = dma.done [#allocation4], 256
    $region57: #{tpu_custom_call.1} parent=1 // pred_fallthru
      _
    %481 = vsyncpa [#allocation3], 1
    %482 = vsyncpa [#allocation6], 1
    %483 = vsyncpa [#allocation9], 1
    %484 = vsyncpa [#allocation4], 1

</llo_original>
